<compile_context>
chip_gen: v5e
topology: v5e:2x2
jax: 0.10.0
libtpu: 0.0.40
codegen_flags: <defaults>
</compile_context>

<pallas_src>
import jax
import jax.numpy as jnp
from jax.experimental import pallas as pl
from jax.experimental.pallas import tpu as pltpu

BN_EPS = 1e-5
_LANE = 128          # lane width / segment alignment
_NEG_BIG = -1e30
_NT_DIMS = (((1,), (1,)), ((), ()))   # A @ B^T contraction (flash-attn "NT" dims)


def _round_up(x, m):
    return (x + m - 1) // m * m


# ---------------------------------------------------------------------------
# Kernel 1: BN-folded projections (single feat stream).
#   k|v from one fused lane-aligned matmul; q emitted transposed as (H, tm)
#   via an MXU NT matmul (no feat transpose, no second feat stream).
# ---------------------------------------------------------------------------
def _proj_kernel(x_ref, wkv_ref, bkv_ref, wqT_ref, bqT_ref,
                 qT_ref, k_ref, v_ref):
    H = k_ref.shape[1]
    dp = v_ref.shape[1]
    seg = wkv_ref.shape[1] - dp          # lane-aligned width of the k segment

    x = x_ref[...]
    kv = jnp.dot(x, wkv_ref[...], preferred_element_type=jnp.float32) + bkv_ref[...]
    k_ref[...] = kv[:, :H]
    v_ref[...] = kv[:, seg:seg + dp].astype(v_ref.dtype)   # bf16 for the MXU/DMA

    # q already transposed: (H, tm) = (H, Din) @ (tm, Din)^T  (MXU NT matmul)
    qT = jax.lax.dot_general(wqT_ref[...], x, _NT_DIMS,
                             preferred_element_type=jnp.float32)
    qT_ref[...] = qT + bqT_ref[...]


# ---------------------------------------------------------------------------
# Kernel 2: edge scores + streaming (flash-style) edge softmax + aggregation.
# Grid = (dst tiles [parallel], src tiles [arbitrary]).  Empty adjacency tiles
# (per-tile flag in SMEM) skip the whole score/softmax update.
# ---------------------------------------------------------------------------
def _attn_kernel(we_ref, flags_ref, qT_ref, k_ref, v_ref, adj_ref,
                 out_ref, m_scr, l_scr, acc_scr):
    i = pl.program_id(0)
    j = pl.program_id(1)

    @pl.when(j == 0)
    def _init():
        m_scr[...] = jnp.full_like(m_scr, _NEG_BIG)
        l_scr[...] = jnp.zeros_like(l_scr)
        acc_scr[...] = jnp.zeros_like(acc_scr)

    @pl.when(flags_ref[i, j] != 0)          # skip all-zero adjacency tiles
    def _update():
        tm, H = k_ref.shape
        tn = qT_ref.shape[1]

        qT = qT_ref[...]                     # (H, TN)  src nodes on lanes (pre-halved)
        kb = k_ref[...]                      # (TM, H)  dst nodes on sublanes (pre-halved)

        # Lane-dense per-h accumulation of e[dst, src]; no (TM, TN, H) intermediate.
        # sigmoid folded wrapper-side into a single tanh: e += we_half[h]*tanh(q/2+k/2).
        e = jnp.zeros((tm, tn), jnp.float32)
        for h in range(H):                   # H small & static -> straight-line code
            s = qT[h:h + 1, :] + kb[:, h:h + 1]          # (TM, TN) via cheap broadcasts
            e = e + we_ref[0, h] * jnp.tanh(s)

        mask = adj_ref[...] > 0              # int8 adjacency -> bool mask (used once)

        # Streaming softmax over incoming edges (src axis).  The unmasked row max
        # still upper-bounds every kept score (tanh is bounded), so exp stays
        # stable and non-edges are zeroed exactly by the single select below.
        m_prev = m_scr[...]
        m_new = jnp.maximum(m_prev, jnp.max(e, axis=1, keepdims=True))
        p = jnp.where(mask, jnp.exp(e - m_new), 0.0)
        alpha = jnp.exp(m_prev - m_new)
        l_scr[...] = alpha * l_scr[...] + jnp.sum(p, axis=1, keepdims=True)
        acc_scr[...] = alpha * acc_scr[...] + jnp.dot(
            p.astype(v_ref.dtype), v_ref[...], preferred_element_type=jnp.float32)
        m_scr[...] = m_new

    @pl.when(j == pl.num_programs(1) - 1)
    def _finalize():
        # Normalize once after aggregation (O(N*Dout) instead of O(N^2) divides).
        # Rows with no incoming edge (incl. padded rows) have l == 0 -> output 0.
        inv = pl.reciprocal(jnp.maximum(l_scr[...], 1e-30), approx=False)
        out_ref[...] = (acc_scr[...] * inv).astype(out_ref.dtype)


def sgat_forward(feat, adj, params, *, tm=256, tn=128):
    """SGAT forward. feat: (N, Din) f32; adj[dst, src] != 0 iff edge src->dst."""
    N, din = feat.shape
    H = params["wq"].shape[1]
    dout = params["wv"].shape[1]

    assert tm % 32 == 0 and tn % 128 == 0
    assert max(tm, tn) % min(tm, tn) == 0
    seg = _LANE                               # lane-aligned k segment width
    dp = _round_up(dout, _LANE)               # lane-padded output width
    assert H <= seg
    f32 = jnp.float32
    bf16 = jnp.bfloat16

    # ---- fold eval-mode BatchNorm into the linear weights (wrapper-side, free) ----
    scale = params["gamma"].astype(f32) * jax.lax.rsqrt(params["var"].astype(f32) + BN_EPS)
    shift = params["beta"].astype(f32) - params["mean"].astype(f32) * scale
    s_col = scale.reshape(din, 1)
    # sigmoid(x) = 0.5 + 0.5*tanh(x/2): fold the x/2 into the q/k weights and the
    # output 0.5 into we; the constant 0.5*sum(we) logit shift cancels in softmax.
    wq_h = 0.5 * (s_col * params["wq"])
    bq_h = 0.5 * (shift @ params["wq"] + params["bq"])
    wk_h = 0.5 * (s_col * params["wk"])
    bk_h = 0.5 * (shift @ params["wk"])
    wv_f = s_col * params["wv"]
    bv_f = shift @ params["wv"]
    we_h = (0.5 * params["we"].reshape(1, H)).astype(f32)

    # ---- fused, lane-aligned k|v weights; q weights pre-transposed & pre-halved ----
    wkv = jnp.zeros((din, seg + dp), f32)
    wkv = wkv.at[:, :H].set(wk_h).at[:, seg:seg + dout].set(wv_f)
    bkv = jnp.zeros((1, seg + dp), f32)
    bkv = bkv.at[:, :H].set(bk_h).at[:, seg:seg + dout].set(bv_f)
    wqT = wq_h.T.astype(f32)                  # (H, Din)
    bqT = bq_h.T.astype(f32)                  # (H, 1)

    # ---- pad node count to the tile grid; adjacency as int8 mask ----
    n_pad = _round_up(N, max(tm, tn))
    feat_p = jnp.zeros((n_pad, din), f32).at[:N].set(feat.astype(f32))
    adj_i8 = jnp.zeros((n_pad, n_pad), jnp.int8).at[:N, :N].set(
        (adj > 0).astype(jnp.int8))

    n_dst, n_src = n_pad // tm, n_pad // tn
    # per-(dst,src)-tile nonzero flags: empty tiles are skipped inside the kernel
    tile_flags = jnp.any(
        adj_i8.reshape(n_dst, tm, n_src, tn) != 0, axis=(1, 3)).astype(jnp.int32)

    vmem_cap = 32 * 1024 * 1024               # stay well under v7x's 64 MiB physical

    # ---- kernel 1: projections ----
    qT, kmat, vmat = pl.pallas_call(
        _proj_kernel,
        grid=(n_pad // tm,),
        in_specs=[
            pl.BlockSpec((tm, din), lambda i: (i, 0)),        # x rows (single stream)
            pl.BlockSpec((din, seg + dp), lambda i: (0, 0)),  # fused k|v weights
            pl.BlockSpec((1, seg + dp), lambda i: (0, 0)),
            pl.BlockSpec((H, din), lambda i: (0, 0)),         # q weights (transposed)
            pl.BlockSpec((H, 1), lambda i: (0, 0)),
        ],
        out_specs=(
            pl.BlockSpec((H, tm), lambda i: (0, i)),          # qT
            pl.BlockSpec((tm, H), lambda i: (i, 0)),          # k
            pl.BlockSpec((tm, dp), lambda i: (i, 0)),         # v (lane padded, bf16)
        ),
        out_shape=(
            jax.ShapeDtypeStruct((H, n_pad), f32),
            jax.ShapeDtypeStruct((n_pad, H), f32),
            jax.ShapeDtypeStruct((n_pad, dp), bf16),
        ),
        compiler_params=pltpu.CompilerParams(
            dimension_semantics=("parallel",),
            vmem_limit_bytes=vmem_cap,
        ),
    )(feat_p, wkv, bkv, wqT, bqT)

    # ---- kernel 2: streamed edge-softmax attention ----
    cost = pl.CostEstimate(
        flops=int(3 * H * n_pad * n_pad + 2 * n_pad * n_pad * dp + 8 * n_pad * n_pad),
        transcendentals=int((H + 1) * n_pad * n_pad),
        bytes_accessed=int(n_pad * n_pad
                           + n_dst * n_pad * (4 * H + 2 * dp)   # re-streamed qT + v
                           + n_pad * 4 * H + n_pad * 4 * dp),
    )
    out_p = pl.pallas_call(
        _attn_kernel,
        grid=(n_dst, n_src),
        in_specs=[
            pl.BlockSpec(memory_space=pltpu.MemorySpace.SMEM),  # w_e/2 scalars
            pl.BlockSpec(memory_space=pltpu.MemorySpace.SMEM),  # per-tile nonzero flags
            pl.BlockSpec((H, tn), lambda i, j: (0, j)),         # qT (src block)
            pl.BlockSpec((tm, H), lambda i, j: (i, 0)),         # k  (dst block)
            pl.BlockSpec((tn, dp), lambda i, j: (j, 0)),        # v  (src block, bf16)
            pl.BlockSpec((tm, tn), lambda i, j: (i, j)),        # adjacency tile (int8)
        ],
        out_specs=pl.BlockSpec((tm, dp), lambda i, j: (i, 0)),
        out_shape=jax.ShapeDtypeStruct((n_pad, dp), f32),
        scratch_shapes=[
            pltpu.VMEM((tm, 1), f32),     # running max
            pltpu.VMEM((tm, 1), f32),     # running sum
            pltpu.VMEM((tm, dp), f32),    # output accumulator
        ],
        compiler_params=pltpu.CompilerParams(
            dimension_semantics=("parallel", "arbitrary"),
            vmem_limit_bytes=vmem_cap,
        ),
        cost_estimate=cost,
    )(we_h, tile_flags, qT, kmat, vmat, adj_i8)

    return out_p[:N, :dout]


def sgat_reference(feat, adj, params):
    """Pure-JAX reference (mirrors the PyTorch module; adj is a 0/1 mask)."""
    x = (feat - params["mean"]) * jax.lax.rsqrt(params["var"] + BN_EPS) * params["gamma"] + params["beta"]
    q = x @ params["wq"] + params["bq"]
    k = x @ params["wk"]
    v = x @ params["wv"]
    s = jax.nn.sigmoid(q[None, :, :] + k[:, None, :])        # (dst, src, H)
    e = jnp.sum(s * params["we"][None, :, :], axis=-1)       # (dst, src)
    e_masked = jnp.where(adj > 0.0, e, -1e30)
    p = jnp.exp(e_masked - jnp.max(e_masked, axis=1, keepdims=True)) * adj
    a = p / jnp.maximum(jnp.sum(p, axis=1, keepdims=True), 1e-30)
    return a @ v


def _make_graph(key, n, p_edge):
    adj = (jax.random.uniform(key, (n, n)) < p_edge).astype(jnp.float32)
    return jnp.maximum(adj, jnp.eye(n, dtype=jnp.float32))    # adj[dst, src], self-loops


if __name__ == "__main__":
    # Small, deterministic problem (one session graph).
    input_dim, hidden_dim, output_dim = 16, 32, 32
    key = jax.random.PRNGKey(0)
    (k_feat, k_adj, k_wq, k_bq, k_wk, k_wv, k_we,
     k_g, k_b, k_m, k_var, k_feat2, k_adj2) = jax.random.split(key, 13)

    scale = 0.1
    params = {
        # Non-trivial running stats to exercise the BN folding (inference mode).
        "gamma": 1.0 + 0.1 * jax.random.normal(k_g, (1, input_dim), jnp.float32),
        "beta":  0.1 * jax.random.normal(k_b, (1, input_dim), jnp.float32),
        "mean":  0.1 * jax.random.normal(k_m, (1, input_dim), jnp.float32),
        "var":   jax.random.uniform(k_var, (1, input_dim), jnp.float32, 0.5, 1.5),
        # Linear layers, stored as (in, out).
        "wq": scale * jax.random.normal(k_wq, (input_dim, hidden_dim), jnp.float32),
        "bq": scale * jax.random.normal(k_bq, (1, hidden_dim), jnp.float32),
        "wk": scale * jax.random.normal(k_wk, (input_dim, hidden_dim), jnp.float32),
        "wv": scale * jax.random.normal(k_wv, (input_dim, output_dim), jnp.float32),
        "we": scale * jax.random.normal(k_we, (1, hidden_dim), jnp.float32),
    }

    # Test 1: tiny graph (exercises empty-tile skipping on the padded src tile).
    N1 = 8
    feat1 = jax.random.normal(k_feat, (N1, input_dim), dtype=jnp.float32)
    adj1 = _make_graph(k_adj, N1, 0.35)
    out1 = jax.block_until_ready(sgat_forward(feat1, adj1, params))
    ref1 = sgat_reference(feat1, adj1, params)
    assert out1.shape == (N1, output_dim)
    err1 = float(jnp.max(jnp.abs(out1 - ref1)))
    assert jnp.allclose(out1, ref1, atol=5e-3, rtol=1e-2), (
        f"Pallas output mismatch vs reference on test 1 (max abs err {err1})")

    # Test 2: graph spanning two src tiles (exercises the online-softmax merge).
    N2 = 150
    feat2 = jax.random.normal(k_feat2, (N2, input_dim), dtype=jnp.float32)
    adj2 = _make_graph(k_adj2, N2, 0.05)
    out2 = jax.block_until_ready(sgat_forward(feat2, adj2, params))
    ref2 = sgat_reference(feat2, adj2, params)
    assert out2.shape == (N2, output_dim)
    err2 = float(jnp.max(jnp.abs(out2 - ref2)))
    assert jnp.allclose(out2, ref2, atol=5e-3, rtol=1e-2), (
        f"Pallas output mismatch vs reference on test 2 (max abs err {err2})")

    print("KERNEL_OK")
</pallas_src>

<mosaic_0001>
module attributes {stable_mosaic.version = 11 : i64} {
  func.func @_proj_kernel(%arg0: i32, %arg1: memref<256x16xf32, #tpu.memory_space<vmem>>, %arg2: memref<16x256xf32, #tpu.memory_space<vmem>>, %arg3: memref<1x256xf32, #tpu.memory_space<vmem>>, %arg4: memref<32x16xf32, #tpu.memory_space<vmem>>, %arg5: memref<32x1xf32, #tpu.memory_space<vmem>>, %arg6: memref<32x256xf32, #tpu.memory_space<vmem>>, %arg7: memref<256x32xf32, #tpu.memory_space<vmem>>, %arg8: memref<256x128xbf16, #tpu.memory_space<vmem>>) attributes {dimension_semantics = [#tpu.dimension_semantics<parallel>], iteration_bounds = array<i64: 1>, scalar_prefetch = 0 : i64, scratch_operands = 0 : i64, tpu.core_type = #tpu.core_type<tc>, window_params = [{transform_indices = @transform_0, window_bounds = array<i64: 256, 16>}, {pipeline_mode = #tpu.pipeline_mode<synchronous>, transform_indices = @transform_1, window_bounds = array<i64: 16, 256>}, {pipeline_mode = #tpu.pipeline_mode<synchronous>, transform_indices = @transform_2, window_bounds = array<i64: 1, 256>}, {pipeline_mode = #tpu.pipeline_mode<synchronous>, transform_indices = @transform_3, window_bounds = array<i64: 32, 16>}, {pipeline_mode = #tpu.pipeline_mode<synchronous>, transform_indices = @transform_4, window_bounds = array<i64: 32, 1>}, {transform_indices = @transform_5, window_bounds = array<i64: 32, 256>}, {transform_indices = @transform_6, window_bounds = array<i64: 256, 32>}, {transform_indices = @transform_7, window_bounds = array<i64: 256, 128>}]} {
    %c0 = arith.constant 0 : index
    %c0_0 = arith.constant 0 : index
    %0 = vector.load %arg1[%c0, %c0_0] : memref<256x16xf32, #tpu.memory_space<vmem>>, vector<256x16xf32>
    %c0_1 = arith.constant 0 : index
    %c0_2 = arith.constant 0 : index
    %1 = vector.load %arg2[%c0_1, %c0_2] : memref<16x256xf32, #tpu.memory_space<vmem>>, vector<16x256xf32>
    %cst = arith.constant dense<0.000000e+00> : vector<256x256xf32>
    %2 = tpu.matmul %0, %1, %cst {dimension_numbers = #tpu.dot_dimension_numbers<[1], [0], [0], [1], [0, 0, 1, 1], [], []>} : vector<256x16xf32>, vector<16x256xf32>, vector<256x256xf32> -> vector<256x256xf32>
    %c0_3 = arith.constant 0 : index
    %c0_4 = arith.constant 0 : index
    %3 = vector.load %arg3[%c0_3, %c0_4] : memref<1x256xf32, #tpu.memory_space<vmem>>, vector<1x256xf32>
    %4 = vector.broadcast %3 : vector<1x256xf32> to vector<256x256xf32>
    %5 = arith.addf %2, %4 : vector<256x256xf32>
    %6 = vector.extract_strided_slice %5 {offsets = [0, 0], sizes = [256, 32], strides = [1, 1]} : vector<256x256xf32> to vector<256x32xf32>
    %c0_5 = arith.constant 0 : index
    %c0_6 = arith.constant 0 : index
    %7 = vector.load %arg7[%c0_5, %c0_6] : memref<256x32xf32, #tpu.memory_space<vmem>>, vector<256x32xf32>
    tpu.vector_store %arg7[%c0_5, %c0_6], %6 {strides = array<i32>} : memref<256x32xf32, #tpu.memory_space<vmem>>, vector<256x32xf32>,
    %8 = vector.extract_strided_slice %5 {offsets = [0, 128], sizes = [256, 128], strides = [1, 1]} : vector<256x256xf32> to vector<256x128xf32>
    %9 = arith.truncf %8 : vector<256x128xf32> to vector<256x128xbf16>
    %c0_7 = arith.constant 0 : index
    %c0_8 = arith.constant 0 : index
    %10 = vector.load %arg8[%c0_7, %c0_8] : memref<256x128xbf16, #tpu.memory_space<vmem>>, vector<256x128xbf16>
    tpu.vector_store %arg8[%c0_7, %c0_8], %9 {strides = array<i32>} : memref<256x128xbf16, #tpu.memory_space<vmem>>, vector<256x128xbf16>,
    %c0_9 = arith.constant 0 : index
    %c0_10 = arith.constant 0 : index
    %11 = vector.load %arg4[%c0_9, %c0_10] : memref<32x16xf32, #tpu.memory_space<vmem>>, vector<32x16xf32>
    %cst_11 = arith.constant dense<0.000000e+00> : vector<32x256xf32>
    %12 = tpu.matmul %11, %0, %cst_11 {dimension_numbers = #tpu.dot_dimension_numbers<[1], [1], [0], [0], [0, 0, 1, 0], [], []>} : vector<32x16xf32>, vector<256x16xf32>, vector<32x256xf32> -> vector<32x256xf32>
    %c0_12 = arith.constant 0 : index
    %c0_13 = arith.constant 0 : index
    %13 = vector.load %arg5[%c0_12, %c0_13] : memref<32x1xf32, #tpu.memory_space<vmem>>, vector<32x1xf32>
    %14 = vector.broadcast %13 : vector<32x1xf32> to vector<32x256xf32>
    %15 = arith.addf %12, %14 : vector<32x256xf32>
    %c0_14 = arith.constant 0 : index
    %c0_15 = arith.constant 0 : index
    %16 = vector.load %arg6[%c0_14, %c0_15] : memref<32x256xf32, #tpu.memory_space<vmem>>, vector<32x256xf32>
    tpu.vector_store %arg6[%c0_14, %c0_15], %15 {strides = array<i32>} : memref<32x256xf32, #tpu.memory_space<vmem>>, vector<32x256xf32>,
    return
  }
  func.func @transform_0(%arg0: i32) -> (i32, i32) {
    %c0_i32 = arith.constant 0 : i32
    %c0_i32_0 = arith.constant 0 : i32
    return %arg0, %c0_i32 : i32, i32
  }
  func.func @transform_1(%arg0: i32) -> (i32, i32) {
    %c0_i32 = arith.constant 0 : i32
    %c0_i32_0 = arith.constant 0 : i32
    %c0_i32_1 = arith.constant 0 : i32
    return %c0_i32, %c0_i32_0 : i32, i32
  }
  func.func @transform_2(%arg0: i32) -> (i32, i32) {
    %c0_i32 = arith.constant 0 : i32
    %c0_i32_0 = arith.constant 0 : i32
    %c0_i32_1 = arith.constant 0 : i32
    return %c0_i32, %c0_i32_0 : i32, i32
  }
  func.func @transform_3(%arg0: i32) -> (i32, i32) {
    %c0_i32 = arith.constant 0 : i32
    %c0_i32_0 = arith.constant 0 : i32
    %c0_i32_1 = arith.constant 0 : i32
    return %c0_i32, %c0_i32_0 : i32, i32
  }
  func.func @transform_4(%arg0: i32) -> (i32, i32) {
    %c0_i32 = arith.constant 0 : i32
    %c0_i32_0 = arith.constant 0 : i32
    %c0_i32_1 = arith.constant 0 : i32
    return %c0_i32, %c0_i32_0 : i32, i32
  }
  func.func @transform_5(%arg0: i32) -> (i32, i32) {
    %c0_i32 = arith.constant 0 : i32
    %c0_i32_0 = arith.constant 0 : i32
    return %c0_i32, %arg0 : i32, i32
  }
  func.func @transform_6(%arg0: i32) -> (i32, i32) {
    %c0_i32 = arith.constant 0 : i32
    %c0_i32_0 = arith.constant 0 : i32
    return %arg0, %c0_i32 : i32, i32
  }
  func.func @transform_7(%arg0: i32) -> (i32, i32) {
    %c0_i32 = arith.constant 0 : i32
    %c0_i32_0 = arith.constant 0 : i32
    return %arg0, %c0_i32 : i32, i32
  }
}

</mosaic_0001>

<llo_original>
// kernel: tpu_custom_call.1
$region0: #{tpu_custom_call.1}
  #allocation0 [shape = 'u32[]', space=smem, size = 0x4, offset = 0x4, fixed_abs, tag = 'smem constant byte address 0x4 - core index']
  #allocation1 [shape = 'u32[72,128]{1,0:T(1,128)}', space=vmem, size = 0x9000, scoped, tag = 'internal scratch']
  %s0 = inlined_call_operand.vmem [shape: f32[256,16], index: 0, kind: input, shape index: {}]
  %s1 = inlined_call_operand.vmem [shape: f32[16,256], index: 1, kind: input, shape index: {}]
  %s2 = inlined_call_operand.vmem [shape: f32[1,256], index: 2, kind: input, shape index: {}]
  %s3 = inlined_call_operand.vmem [shape: f32[32,16], index: 3, kind: input, shape index: {}]
  %s4 = inlined_call_operand.vmem [shape: f32[32,1], index: 4, kind: input, shape index: {}]
  %s5 = inlined_call_operand.hbm [shape: f32[32,256], index: 5, kind: output, shape index: {0}]
  %s6 = inlined_call_operand.vmem [shape: f32[256,32], index: 6, kind: output, shape index: {1}]
  %s7 = inlined_call_operand.hbm [shape: bf16[256,128], index: 7, kind: output, shape index: {2}]
  %8 = xla_tuple %s5, %s6, %s7
  %s9 = sld [smem:[#allocation0]]
  $region46: #{tpu_custom_call.1} parent=0
    _
  %s11 = ssub.s32 1, %s9
  %s12 = scalar_select 0, %s11, %s9
  $region1: #{tpu_custom_call.1} parent=0
    #allocation2 [shape = 'u8[32768]{0}', space=vmem, size = 0x8000, scoped, tag = 'output window, operand 0, single buffered']
    #allocation3 [shape = 's32[1]{0}', space=sflag, size = 0x4, scoped, tag = 'scoped memory for tpu_custom_call.1']
    #allocation4 [shape = 'u8[65536]{0}', space=vmem, size = 0x10000, scoped, tag = 'output window, operand 2, single buffered']
    #allocation5 [shape = 's32[1]{0}', space=sflag, size = 0x4, scoped, tag = 'scoped memory for tpu_custom_call.1']
    %13 = vsyncpa [#allocation3], 0
    %14 = vsyncpa [#allocation5], 0
    // Predicated region
    $region2: #{tpu_custom_call.1} parent=1 // pred_check
      _
    $region3: #{tpu_custom_call.1} parent=1 // pred_check_branch
      %16 = sbr.rel (0) target = $region5
    $region4: #{tpu_custom_call.1} parent=1 // pred_region
      _
    $region5: #{tpu_custom_call.1} parent=1 // pred_fallthru
      _
    // Predicated region
    $region6: #{tpu_custom_call.1} parent=1 // pred_check
      _
    $region7: #{tpu_custom_call.1} parent=1 // pred_check_branch
      %18 = sbr.rel (0) target = $region9
    $region8: #{tpu_custom_call.1} parent=1 // pred_region
      _
    $region9: #{tpu_custom_call.1} parent=1 // pred_fallthru
      _
    // Predicated region
    $region10: #{tpu_custom_call.1} parent=1 // pred_check
      _
    $region11: #{tpu_custom_call.1} parent=1 // pred_check_branch
      %20 = sbr.rel (0) target = $region13
    $region12: #{tpu_custom_call.1} parent=1 // pred_region
      _
    $region13: #{tpu_custom_call.1} parent=1 // pred_fallthru
      _
    // Predicated region
    $region14: #{tpu_custom_call.1} parent=1 // pred_check
      _
    $region15: #{tpu_custom_call.1} parent=1 // pred_check_branch
      %22 = sbr.rel (0) target = $region17
    $region16: #{tpu_custom_call.1} parent=1 // pred_region
      _
    $region17: #{tpu_custom_call.1} parent=1 // pred_fallthru
      _
    // Predicated region
    $region18: #{tpu_custom_call.1} parent=1 // pred_check
      _
    $region19: #{tpu_custom_call.1} parent=1 // pred_check_branch
      %24 = sbr.rel (0) target = $region21
    $region20: #{tpu_custom_call.1} parent=1 // pred_region
      _
    $region21: #{tpu_custom_call.1} parent=1 // pred_fallthru
      _
    %v25 = vld [vmem:[%s0] sm:$0xff]
    %v26 = vld [vmem:[%s0 + $0x8] sm:$0xff]
    %v27 = vld [vmem:[%s0 + $0x10] sm:$0xff]
    %v28 = vld [vmem:[%s0 + $0x18] sm:$0xff]
    %v29 = vld [vmem:[%s0 + $0x20] sm:$0xff]
    %v30 = vld [vmem:[%s0 + $0x28] sm:$0xff]
    %v31 = vld [vmem:[%s0 + $0x30] sm:$0xff]
    %v32 = vld [vmem:[%s0 + $0x38] sm:$0xff]
    %v33 = vld [vmem:[%s0 + $0x40] sm:$0xff]
    %v34 = vld [vmem:[%s0 + $0x48] sm:$0xff]
    %v35 = vld [vmem:[%s0 + $0x50] sm:$0xff]
    %v36 = vld [vmem:[%s0 + $0x58] sm:$0xff]
    %v37 = vld [vmem:[%s0 + $0x60] sm:$0xff]
    %v38 = vld [vmem:[%s0 + $0x68] sm:$0xff]
    %v39 = vld [vmem:[%s0 + $0x70] sm:$0xff]
    %v40 = vld [vmem:[%s0 + $0x78] sm:$0xff]
    %v41 = vld [vmem:[%s0 + $0x80] sm:$0xff]
    %v42 = vld [vmem:[%s0 + $0x88] sm:$0xff]
    %v43 = vld [vmem:[%s0 + $0x90] sm:$0xff]
    %v44 = vld [vmem:[%s0 + $0x98] sm:$0xff]
    %v45 = vld [vmem:[%s0 + $0xa0] sm:$0xff]
    %v46 = vld [vmem:[%s0 + $0xa8] sm:$0xff]
    %v47 = vld [vmem:[%s0 + $0xb0] sm:$0xff]
    %v48 = vld [vmem:[%s0 + $0xb8] sm:$0xff]
    %v49 = vld [vmem:[%s0 + $0xc0] sm:$0xff]
    %v50 = vld [vmem:[%s0 + $0xc8] sm:$0xff]
    %v51 = vld [vmem:[%s0 + $0xd0] sm:$0xff]
    %v52 = vld [vmem:[%s0 + $0xd8] sm:$0xff]
    %v53 = vld [vmem:[%s0 + $0xe0] sm:$0xff]
    %v54 = vld [vmem:[%s0 + $0xe8] sm:$0xff]
    %v55 = vld [vmem:[%s0 + $0xf0] sm:$0xff]
    %v56 = vld [vmem:[%s0 + $0xf8] sm:$0xff]
    %v57 = vld [vmem:[%s1] sm:$0xff]
    %v58 = vld [vmem:[%s1 + $0x8] sm:$0xff]
    %v59 = vld [vmem:[%s1 + $0x10] sm:$0xff]
    %v60 = vld [vmem:[%s1 + $0x18] sm:$0xff]
    %v61 = vld [vmem:[%s2] sm:$0x3]
    %v63 = vperm.slane %v61, 0
    %v64 = vperm.slane %v61, 1
    %vm67 = vcmask 130048
    %v69 = vsel %vm67, %v25, 0
    %v72 = vsel %vm67, %v26, 0
    %v75 = vsel %vm67, %v27, 0
    %v78 = vsel %vm67, %v28, 0
    %v81 = vsel %vm67, %v29, 0
    %v84 = vsel %vm67, %v30, 0
    %v87 = vsel %vm67, %v31, 0
    %v90 = vsel %vm67, %v32, 0
    %v93 = vsel %vm67, %v33, 0
    %v96 = vsel %vm67, %v34, 0
    %v99 = vsel %vm67, %v35, 0
    %v102 = vsel %vm67, %v36, 0
    %v105 = vsel %vm67, %v37, 0
    %v108 = vsel %vm67, %v38, 0
    %v111 = vsel %vm67, %v39, 0
    %v114 = vsel %vm67, %v40, 0
    %v117 = vsel %vm67, %v41, 0
    %v120 = vsel %vm67, %v42, 0
    %v123 = vsel %vm67, %v43, 0
    %v126 = vsel %vm67, %v44, 0
    %v129 = vsel %vm67, %v45, 0
    %v132 = vsel %vm67, %v46, 0
    %v135 = vsel %vm67, %v47, 0
    %v138 = vsel %vm67, %v48, 0
    %v141 = vsel %vm67, %v49, 0
    %v144 = vsel %vm67, %v50, 0
    %v147 = vsel %vm67, %v51, 0
    %v150 = vsel %vm67, %v52, 0
    %v153 = vsel %vm67, %v53, 0
    %v156 = vsel %vm67, %v54, 0
    %v159 = vsel %vm67, %v55, 0
    %v162 = vsel %vm67, %v56, 0
    %164 = vmatpush.msra.mxu0 0.0
    %165 = vmatpush.msra.mxu0 0.0
    %166 = vmatpush.msra.mxu0 0.0
    %167 = vmatpush.msra.mxu0 0.0
    %168 = vmatpush.msra.mxu0 0.0
    %169 = vmatpush.msra.mxu0 0.0
    %170 = vmatpush.msra.mxu0 0.0
    %171 = vmatpush.msra.mxu0 0.0
    %172 = vmatpush.msra.mxu0 0.0
    %173 = vmatpush.msra.mxu0 0.0
    %174 = vmatpush.msra.mxu0 0.0
    %175 = vmatpush.msra.mxu0 0.0
    %176 = vmatpush.msra.mxu0 0.0
    %177 = vmatpush.msra.mxu0 0.0
    %178 = vmatpush.msra.mxu0 %v59
    %179 = vmatpush.msra.mxu0 %v57
    %180 = vmatmul.f32.gmra.mxu0 %v69
    %v181 = vpop.f32.mrf.mxu0
    %v182 = vadd.f32 %v63, %v181
    %183 = vmatmul.f32.gmra.mxu0 %v72
    %v184 = vpop.f32.mrf.mxu0
    %v185 = vadd.f32 %v63, %v184
    %186 = vmatmul.f32.gmra.mxu0 %v75
    %v187 = vpop.f32.mrf.mxu0
    %v188 = vadd.f32 %v63, %v187
    %189 = vmatmul.f32.gmra.mxu0 %v78
    %v190 = vpop.f32.mrf.mxu0
    %v191 = vadd.f32 %v63, %v190
    %192 = vmatmul.f32.gmra.mxu0 %v81
    %v193 = vpop.f32.mrf.mxu0
    %v194 = vadd.f32 %v63, %v193
    %195 = vmatmul.f32.gmra.mxu0 %v84
    %v196 = vpop.f32.mrf.mxu0
    %v197 = vadd.f32 %v63, %v196
    %198 = vmatmul.f32.gmra.mxu0 %v87
    %v199 = vpop.f32.mrf.mxu0
    %v200 = vadd.f32 %v63, %v199
    %201 = vmatmul.f32.gmra.mxu0 %v90
    %v202 = vpop.f32.mrf.mxu0
    %v203 = vadd.f32 %v63, %v202
    %204 = vmatmul.f32.gmra.mxu0 %v93
    %v205 = vpop.f32.mrf.mxu0
    %v206 = vadd.f32 %v63, %v205
    %207 = vmatmul.f32.gmra.mxu0 %v96
    %v208 = vpop.f32.mrf.mxu0
    %v209 = vadd.f32 %v63, %v208
    %210 = vmatmul.f32.gmra.mxu0 %v99
    %v211 = vpop.f32.mrf.mxu0
    %v212 = vadd.f32 %v63, %v211
    %213 = vmatmul.f32.gmra.mxu0 %v102
    %v214 = vpop.f32.mrf.mxu0
    %v215 = vadd.f32 %v63, %v214
    %216 = vmatmul.f32.gmra.mxu0 %v105
    %v217 = vpop.f32.mrf.mxu0
    %v218 = vadd.f32 %v63, %v217
    %219 = vmatmul.f32.gmra.mxu0 %v108
    %v220 = vpop.f32.mrf.mxu0
    %v221 = vadd.f32 %v63, %v220
    %222 = vmatmul.f32.gmra.mxu0 %v111
    %v223 = vpop.f32.mrf.mxu0
    %v224 = vadd.f32 %v63, %v223
    %225 = vmatmul.f32.gmra.mxu0 %v114
    %v226 = vpop.f32.mrf.mxu0
    %v227 = vadd.f32 %v63, %v226
    %228 = vmatmul.f32.gmra.mxu0 %v117
    %v229 = vpop.f32.mrf.mxu0
    %v230 = vadd.f32 %v63, %v229
    %231 = vmatmul.f32.gmra.mxu0 %v120
    %v232 = vpop.f32.mrf.mxu0
    %v233 = vadd.f32 %v63, %v232
    %234 = vmatmul.f32.gmra.mxu0 %v123
    %v235 = vpop.f32.mrf.mxu0
    %v236 = vadd.f32 %v63, %v235
    %237 = vmatmul.f32.gmra.mxu0 %v126
    %v238 = vpop.f32.mrf.mxu0
    %v239 = vadd.f32 %v63, %v238
    %240 = vmatmul.f32.gmra.mxu0 %v129
    %v241 = vpop.f32.mrf.mxu0
    %v242 = vadd.f32 %v63, %v241
    %243 = vmatmul.f32.gmra.mxu0 %v132
    %v244 = vpop.f32.mrf.mxu0
    %v245 = vadd.f32 %v63, %v244
    %246 = vmatmul.f32.gmra.mxu0 %v135
    %v247 = vpop.f32.mrf.mxu0
    %v248 = vadd.f32 %v63, %v247
    %249 = vmatmul.f32.gmra.mxu0 %v138
    %v250 = vpop.f32.mrf.mxu0
    %v251 = vadd.f32 %v63, %v250
    %252 = vmatmul.f32.gmra.mxu0 %v141
    %v253 = vpop.f32.mrf.mxu0
    %v254 = vadd.f32 %v63, %v253
    %255 = vmatmul.f32.gmra.mxu0 %v144
    %v256 = vpop.f32.mrf.mxu0
    %v257 = vadd.f32 %v63, %v256
    %258 = vmatmul.f32.gmra.mxu0 %v147
    %v259 = vpop.f32.mrf.mxu0
    %v260 = vadd.f32 %v63, %v259
    %261 = vmatmul.f32.gmra.mxu0 %v150
    %v262 = vpop.f32.mrf.mxu0
    %v263 = vadd.f32 %v63, %v262
    %264 = vmatmul.f32.gmra.mxu0 %v153
    %v265 = vpop.f32.mrf.mxu0
    %v266 = vadd.f32 %v63, %v265
    %267 = vmatmul.f32.gmra.mxu0 %v156
    %v268 = vpop.f32.mrf.mxu0
    %v269 = vadd.f32 %v63, %v268
    %270 = vmatmul.f32.gmra.mxu0 %v159
    %v271 = vpop.f32.mrf.mxu0
    %v272 = vadd.f32 %v63, %v271
    %273 = vmatmul.f32.gmra.mxu0 %v162
    %v274 = vpop.f32.mrf.mxu0
    %v275 = vadd.f32 %v63, %v274
    %276 = vdwg.mxu0
    %277 = vmatpush.msra.mxu0 0.0
    %278 = vmatpush.msra.mxu0 0.0
    %279 = vmatpush.msra.mxu0 0.0
    %280 = vmatpush.msra.mxu0 0.0
    %281 = vmatpush.msra.mxu0 0.0
    %282 = vmatpush.msra.mxu0 0.0
    %283 = vmatpush.msra.mxu0 0.0
    %284 = vmatpush.msra.mxu0 0.0
    %285 = vmatpush.msra.mxu0 0.0
    %286 = vmatpush.msra.mxu0 0.0
    %287 = vmatpush.msra.mxu0 0.0
    %288 = vmatpush.msra.mxu0 0.0
    %289 = vmatpush.msra.mxu0 0.0
    %290 = vmatpush.msra.mxu0 0.0
    %291 = vmatpush.msra.mxu0 %v60
    %292 = vmatpush.msra.mxu0 %v58
    %293 = vmatmul.f32.gmra.mxu0 %v69
    %v294 = vpop.f32.mrf.mxu0
    %v295 = vadd.f32 %v64, %v294
    %296 = vmatmul.f32.gmra.mxu0 %v72
    %v297 = vpop.f32.mrf.mxu0
    %v298 = vadd.f32 %v64, %v297
    %299 = vmatmul.f32.gmra.mxu0 %v75
    %v300 = vpop.f32.mrf.mxu0
    %v301 = vadd.f32 %v64, %v300
    %302 = vmatmul.f32.gmra.mxu0 %v78
    %v303 = vpop.f32.mrf.mxu0
    %v304 = vadd.f32 %v64, %v303
    %305 = vmatmul.f32.gmra.mxu0 %v81
    %v306 = vpop.f32.mrf.mxu0
    %v307 = vadd.f32 %v64, %v306
    %308 = vmatmul.f32.gmra.mxu0 %v84
    %v309 = vpop.f32.mrf.mxu0
    %v310 = vadd.f32 %v64, %v309
    %311 = vmatmul.f32.gmra.mxu0 %v87
    %v312 = vpop.f32.mrf.mxu0
    %v313 = vadd.f32 %v64, %v312
    %314 = vmatmul.f32.gmra.mxu0 %v90
    %v315 = vpop.f32.mrf.mxu0
    %v316 = vadd.f32 %v64, %v315
    %317 = vmatmul.f32.gmra.mxu0 %v93
    %v318 = vpop.f32.mrf.mxu0
    %v319 = vadd.f32 %v64, %v318
    %320 = vmatmul.f32.gmra.mxu0 %v96
    %v321 = vpop.f32.mrf.mxu0
    %v322 = vadd.f32 %v64, %v321
    %323 = vmatmul.f32.gmra.mxu0 %v99
    %v324 = vpop.f32.mrf.mxu0
    %v325 = vadd.f32 %v64, %v324
    %326 = vmatmul.f32.gmra.mxu0 %v102
    %v327 = vpop.f32.mrf.mxu0
    %v328 = vadd.f32 %v64, %v327
    %329 = vmatmul.f32.gmra.mxu0 %v105
    %v330 = vpop.f32.mrf.mxu0
    %v331 = vadd.f32 %v64, %v330
    %332 = vmatmul.f32.gmra.mxu0 %v108
    %v333 = vpop.f32.mrf.mxu0
    %v334 = vadd.f32 %v64, %v333
    %335 = vmatmul.f32.gmra.mxu0 %v111
    %v336 = vpop.f32.mrf.mxu0
    %v337 = vadd.f32 %v64, %v336
    %338 = vmatmul.f32.gmra.mxu0 %v114
    %v339 = vpop.f32.mrf.mxu0
    %v340 = vadd.f32 %v64, %v339
    %341 = vmatmul.f32.gmra.mxu0 %v117
    %v342 = vpop.f32.mrf.mxu0
    %v343 = vadd.f32 %v64, %v342
    %344 = vmatmul.f32.gmra.mxu0 %v120
    %v345 = vpop.f32.mrf.mxu0
    %v346 = vadd.f32 %v64, %v345
    %347 = vmatmul.f32.gmra.mxu0 %v123
    %v348 = vpop.f32.mrf.mxu0
    %v349 = vadd.f32 %v64, %v348
    %350 = vmatmul.f32.gmra.mxu0 %v126
    %v351 = vpop.f32.mrf.mxu0
    %v352 = vadd.f32 %v64, %v351
    %353 = vmatmul.f32.gmra.mxu0 %v129
    %v354 = vpop.f32.mrf.mxu0
    %v355 = vadd.f32 %v64, %v354
    %356 = vmatmul.f32.gmra.mxu0 %v132
    %v357 = vpop.f32.mrf.mxu0
    %v358 = vadd.f32 %v64, %v357
    %359 = vmatmul.f32.gmra.mxu0 %v135
    %v360 = vpop.f32.mrf.mxu0
    %v361 = vadd.f32 %v64, %v360
    %362 = vmatmul.f32.gmra.mxu0 %v138
    %v363 = vpop.f32.mrf.mxu0
    %v364 = vadd.f32 %v64, %v363
    %365 = vmatmul.f32.gmra.mxu0 %v141
    %v366 = vpop.f32.mrf.mxu0
    %v367 = vadd.f32 %v64, %v366
    %368 = vmatmul.f32.gmra.mxu0 %v144
    %v369 = vpop.f32.mrf.mxu0
    %v370 = vadd.f32 %v64, %v369
    %371 = vmatmul.f32.gmra.mxu0 %v147
    %v372 = vpop.f32.mrf.mxu0
    %v373 = vadd.f32 %v64, %v372
    %374 = vmatmul.f32.gmra.mxu0 %v150
    %v375 = vpop.f32.mrf.mxu0
    %v376 = vadd.f32 %v64, %v375
    %377 = vmatmul.f32.gmra.mxu0 %v153
    %v378 = vpop.f32.mrf.mxu0
    %v379 = vadd.f32 %v64, %v378
    %380 = vmatmul.f32.gmra.mxu0 %v156
    %v381 = vpop.f32.mrf.mxu0
    %v382 = vadd.f32 %v64, %v381
    %383 = vmatmul.f32.gmra.mxu0 %v159
    %v384 = vpop.f32.mrf.mxu0
    %v385 = vadd.f32 %v64, %v384
    %386 = vmatmul.f32.gmra.mxu0 %v162
    %v387 = vpop.f32.mrf.mxu0
    %v388 = vadd.f32 %v64, %v387
    %389 = vdwg.mxu0
    %vm390 = vcmask 261120
    %391 = vst.msk [vmem:[%s6] sm:$0xff] %vm390, %v182
    %392 = vst.msk [vmem:[%s6 + $0x8] sm:$0xff] %vm390, %v185
    %393 = vst.msk [vmem:[%s6 + $0x10] sm:$0xff] %vm390, %v188
    %394 = vst.msk [vmem:[%s6 + $0x18] sm:$0xff] %vm390, %v191
    %395 = vst.msk [vmem:[%s6 + $0x20] sm:$0xff] %vm390, %v194
    %396 = vst.msk [vmem:[%s6 + $0x28] sm:$0xff] %vm390, %v197
    %397 = vst.msk [vmem:[%s6 + $0x30] sm:$0xff] %vm390, %v200
    %398 = vst.msk [vmem:[%s6 + $0x38] sm:$0xff] %vm390, %v203
    %399 = vst.msk [vmem:[%s6 + $0x40] sm:$0xff] %vm390, %v206
    %400 = vst.msk [vmem:[%s6 + $0x48] sm:$0xff] %vm390, %v209
    %401 = vst.msk [vmem:[%s6 + $0x50] sm:$0xff] %vm390, %v212
    %402 = vst.msk [vmem:[%s6 + $0x58] sm:$0xff] %vm390, %v215
    %403 = vst.msk [vmem:[%s6 + $0x60] sm:$0xff] %vm390, %v218
    %404 = vst.msk [vmem:[%s6 + $0x68] sm:$0xff] %vm390, %v221
    %405 = vst.msk [vmem:[%s6 + $0x70] sm:$0xff] %vm390, %v224
    %406 = vst.msk [vmem:[%s6 + $0x78] sm:$0xff] %vm390, %v227
    %407 = vst.msk [vmem:[%s6 + $0x80] sm:$0xff] %vm390, %v230
    %408 = vst.msk [vmem:[%s6 + $0x88] sm:$0xff] %vm390, %v233
    %409 = vst.msk [vmem:[%s6 + $0x90] sm:$0xff] %vm390, %v236
    %410 = vst.msk [vmem:[%s6 + $0x98] sm:$0xff] %vm390, %v239
    %411 = vst.msk [vmem:[%s6 + $0xa0] sm:$0xff] %vm390, %v242
    %412 = vst.msk [vmem:[%s6 + $0xa8] sm:$0xff] %vm390, %v245
    %413 = vst.msk [vmem:[%s6 + $0xb0] sm:$0xff] %vm390, %v248
    %414 = vst.msk [vmem:[%s6 + $0xb8] sm:$0xff] %vm390, %v251
    %415 = vst.msk [vmem:[%s6 + $0xc0] sm:$0xff] %vm390, %v254
    %416 = vst.msk [vmem:[%s6 + $0xc8] sm:$0xff] %vm390, %v257
    %417 = vst.msk [vmem:[%s6 + $0xd0] sm:$0xff] %vm390, %v260
    %418 = vst.msk [vmem:[%s6 + $0xd8] sm:$0xff] %vm390, %v263
    %419 = vst.msk [vmem:[%s6 + $0xe0] sm:$0xff] %vm390, %v266
    %420 = vst.msk [vmem:[%s6 + $0xe8] sm:$0xff] %vm390, %v269
    %421 = vst.msk [vmem:[%s6 + $0xf0] sm:$0xff] %vm390, %v272
    %422 = vst.msk [vmem:[%s6 + $0xf8] sm:$0xff] %vm390, %v275
    %v423 = vpack.c.bf16 %v295, %v295
    %v424 = vpack.c.bf16 %v298, %v298
    %v425 = vpack.c.bf16 %v301, %v301
    %v426 = vpack.c.bf16 %v304, %v304
    %v427 = vpack.c.bf16 %v307, %v307
    %v428 = vpack.c.bf16 %v310, %v310
    %v429 = vpack.c.bf16 %v313, %v313
    %v430 = vpack.c.bf16 %v316, %v316
    %v431 = vpack.c.bf16 %v319, %v319
    %v432 = vpack.c.bf16 %v322, %v322
    %v433 = vpack.c.bf16 %v325, %v325
    %v434 = vpack.c.bf16 %v328, %v328
    %v435 = vpack.c.bf16 %v331, %v331
    %v436 = vpack.c.bf16 %v334, %v334
    %v437 = vpack.c.bf16 %v337, %v337
    %v438 = vpack.c.bf16 %v340, %v340
    %v439 = vpack.c.bf16 %v343, %v343
    %v440 = vpack.c.bf16 %v346, %v346
    %v441 = vpack.c.bf16 %v349, %v349
    %v442 = vpack.c.bf16 %v352, %v352
    %v443 = vpack.c.bf16 %v355, %v355
    %v444 = vpack.c.bf16 %v358, %v358
    %v445 = vpack.c.bf16 %v361, %v361
    %v446 = vpack.c.bf16 %v364, %v364
    %v447 = vpack.c.bf16 %v367, %v367
    %v448 = vpack.c.bf16 %v370, %v370
    %v449 = vpack.c.bf16 %v373, %v373
    %v450 = vpack.c.bf16 %v376, %v376
    %v451 = vpack.c.bf16 %v379, %v379
    %v452 = vpack.c.bf16 %v382, %v382
    %v453 = vpack.c.bf16 %v385, %v385
    %v454 = vpack.c.bf16 %v388, %v388
    %455 = vst [vmem:[#allocation4] sm:$0xf] %v423
    %456 = vst [vmem:[#allocation4 + $0x4] sm:$0xf] %v424
    %457 = vst [vmem:[#allocation4 + $0x8] sm:$0xf] %v425
    %458 = vst [vmem:[#allocation4 + $0xc] sm:$0xf] %v426
    %459 = vst [vmem:[#allocation4 + $0x10] sm:$0xf] %v427
    %460 = vst [vmem:[#allocation4 + $0x14] sm:$0xf] %v428
    %461 = vst [vmem:[#allocation4 + $0x18] sm:$0xf] %v429
    %462 = vst [vmem:[#allocation4 + $0x1c] sm:$0xf] %v430
    %463 = vst [vmem:[#allocation4 + $0x20] sm:$0xf] %v431
    %464 = vst [vmem:[#allocation4 + $0x24] sm:$0xf] %v432
    %465 = vst [vmem:[#allocation4 + $0x28] sm:$0xf] %v433
    %466 = vst [vmem:[#allocation4 + $0x2c] sm:$0xf] %v434
    %467 = vst [vmem:[#allocation4 + $0x30] sm:$0xf] %v435
    %468 = vst [vmem:[#allocation4 + $0x34] sm:$0xf] %v436
    %469 = vst [vmem:[#allocation4 + $0x38] sm:$0xf] %v437
    %470 = vst [vmem:[#allocation4 + $0x3c] sm:$0xf] %v438
    %471 = vst [vmem:[#allocation4 + $0x40] sm:$0xf] %v439
    %472 = vst [vmem:[#allocation4 + $0x44] sm:$0xf] %v440
    %473 = vst [vmem:[#allocation4 + $0x48] sm:$0xf] %v441
    %474 = vst [vmem:[#allocation4 + $0x4c] sm:$0xf] %v442
    %475 = vst [vmem:[#allocation4 + $0x50] sm:$0xf] %v443
    %476 = vst [vmem:[#allocation4 + $0x54] sm:$0xf] %v444
    %477 = vst [vmem:[#allocation4 + $0x58] sm:$0xf] %v445
    %478 = vst [vmem:[#allocation4 + $0x5c] sm:$0xf] %v446
    %479 = vst [vmem:[#allocation4 + $0x60] sm:$0xf] %v447
    %480 = vst [vmem:[#allocation4 + $0x64] sm:$0xf] %v448
    %481 = vst [vmem:[#allocation4 + $0x68] sm:$0xf] %v449
    %482 = vst [vmem:[#allocation4 + $0x6c] sm:$0xf] %v450
    %483 = vst [vmem:[#allocation4 + $0x70] sm:$0xf] %v451
    %484 = vst [vmem:[#allocation4 + $0x74] sm:$0xf] %v452
    %485 = vst [vmem:[#allocation4 + $0x78] sm:$0xf] %v453
    %486 = vst [vmem:[#allocation4 + $0x7c] sm:$0xf] %v454
    %v487 = vld [vmem:[%s3] sm:$0xff]
    %v488 = vld [vmem:[%s3 + $0x8] sm:$0xff]
    %v489 = vld [vmem:[%s3 + $0x10] sm:$0xff]
    %v490 = vld [vmem:[%s3 + $0x18] sm:$0xff]
    %v491 = vld [vmem:[%s4] sm:$0xff]
    %v492 = vld [vmem:[%s4 + $0x8] sm:$0xff]
    %v493 = vld [vmem:[%s4 + $0x10] sm:$0xff]
    %v494 = vld [vmem:[%s4 + $0x18] sm:$0xff]
    %496 = vset.pattern.permute.xlu0 0
    %497 = vperm.xlu0 %496, %v491
    %v498 = vpop.permute.xlu0 %497
    %501 = vset.pattern.permute.xlu0 0
    %502 = vperm.xlu0 %501, %v492
    %v503 = vpop.permute.xlu0 %502
    %506 = vset.pattern.permute.xlu0 0
    %507 = vperm.xlu0 %506, %v493
    %v508 = vpop.permute.xlu0 %507
    %511 = vset.pattern.permute.xlu0 0
    %512 = vperm.xlu0 %511, %v494
    %v513 = vpop.permute.xlu0 %512
    %v516 = vsel %vm67, %v487, 0
    %v519 = vsel %vm67, %v488, 0
    %v522 = vsel %vm67, %v489, 0
    %v525 = vsel %vm67, %v490, 0
    %527 = vmatpush.xpose.msra.mxu0 %v114
    %528 = vmatpush.xpose.msra.mxu0 %v111
    %529 = vmatpush.xpose.msra.mxu0 %v108
    %530 = vmatpush.xpose.msra.mxu0 %v105
    %531 = vmatpush.xpose.msra.mxu0 %v102
    %532 = vmatpush.xpose.msra.mxu0 %v99
    %533 = vmatpush.xpose.msra.mxu0 %v96
    %534 = vmatpush.xpose.msra.mxu0 %v93
    %535 = vmatpush.xpose.msra.mxu0 %v90
    %536 = vmatpush.xpose.msra.mxu0 %v87
    %537 = vmatpush.xpose.msra.mxu0 %v84
    %538 = vmatpush.xpose.msra.mxu0 %v81
    %539 = vmatpush.xpose.msra.mxu0 %v78
    %540 = vmatpush.xpose.msra.mxu0 %v75
    %541 = vmatpush.xpose.msra.mxu0 %v72
    %542 = vmatpush.xpose.msra.mxu0 %v69
    %543 = vmatmul.f32.gmra.mxu0 %v516
    %v544 = vpop.f32.mrf.mxu0
    %v545 = vadd.f32 %v498, %v544
    %546 = vmatmul.f32.gmra.mxu0 %v519
    %v547 = vpop.f32.mrf.mxu0
    %v548 = vadd.f32 %v503, %v547
    %549 = vmatmul.f32.gmra.mxu0 %v522
    %v550 = vpop.f32.mrf.mxu0
    %v551 = vadd.f32 %v508, %v550
    %552 = vmatmul.f32.gmra.mxu0 %v525
    %v553 = vpop.f32.mrf.mxu0
    %v554 = vadd.f32 %v513, %v553
    %555 = vdwg.mxu0
    %556 = vmatpush.xpose.msra.mxu0 %v162
    %557 = vmatpush.xpose.msra.mxu0 %v159
    %558 = vmatpush.xpose.msra.mxu0 %v156
    %559 = vmatpush.xpose.msra.mxu0 %v153
    %560 = vmatpush.xpose.msra.mxu0 %v150
    %561 = vmatpush.xpose.msra.mxu0 %v147
    %562 = vmatpush.xpose.msra.mxu0 %v144
    %563 = vmatpush.xpose.msra.mxu0 %v141
    %564 = vmatpush.xpose.msra.mxu0 %v138
    %565 = vmatpush.xpose.msra.mxu0 %v135
    %566 = vmatpush.xpose.msra.mxu0 %v132
    %567 = vmatpush.xpose.msra.mxu0 %v129
    %568 = vmatpush.xpose.msra.mxu0 %v126
    %569 = vmatpush.xpose.msra.mxu0 %v123
    %570 = vmatpush.xpose.msra.mxu0 %v120
    %571 = vmatpush.xpose.msra.mxu0 %v117
    %572 = vmatmul.f32.gmra.mxu0 %v516
    %v573 = vpop.f32.mrf.mxu0
    %v574 = vadd.f32 %v498, %v573
    %575 = vmatmul.f32.gmra.mxu0 %v519
    %v576 = vpop.f32.mrf.mxu0
    %v577 = vadd.f32 %v503, %v576
    %578 = vmatmul.f32.gmra.mxu0 %v522
    %v579 = vpop.f32.mrf.mxu0
    %v580 = vadd.f32 %v508, %v579
    %581 = vmatmul.f32.gmra.mxu0 %v525
    %v582 = vpop.f32.mrf.mxu0
    %v583 = vadd.f32 %v513, %v582
    %584 = vdwg.mxu0
    %585 = vst [vmem:[#allocation2] sm:$0xff] %v545
    %586 = vst [vmem:[#allocation2 + $0x8] sm:$0xff] %v574
    %587 = vst [vmem:[#allocation2 + $0x10] sm:$0xff] %v548
    %588 = vst [vmem:[#allocation2 + $0x18] sm:$0xff] %v577
    %589 = vst [vmem:[#allocation2 + $0x20] sm:$0xff] %v551
    %590 = vst [vmem:[#allocation2 + $0x28] sm:$0xff] %v580
    %591 = vst [vmem:[#allocation2 + $0x30] sm:$0xff] %v554
    %592 = vst [vmem:[#allocation2 + $0x38] sm:$0xff] %v583
    // Predicated region
    $region22: #{tpu_custom_call.1} parent=1 // pred_check
      _
    $region23: #{tpu_custom_call.1} parent=1 // pred_check_branch
      %594 = sbr.rel (0) target = $region25
    $region24: #{tpu_custom_call.1} parent=1 // pred_region
      %596 = vsyncadd [#allocation3], 0
      %s597 = sshll.u32 [#allocation2], 4
      %s598 = int_to_ptr.vmem [resolvable:$true] %s597
      %s599 = sshll.u32 %s5, 4
      %s600 = int_to_ptr.hbm [resolvable:$true] %s599
      %605 = dma.vmem_to_hbm [thread:$0]  %s598, 1024, %s600, [#allocation3], 256, 256, 16
    $region25: #{tpu_custom_call.1} parent=1 // pred_fallthru
      _
    // Predicated region
    $region26: #{tpu_custom_call.1} parent=1 // pred_check
      _
    $region27: #{tpu_custom_call.1} parent=1 // pred_check_branch
      %607 = sbr.rel (0) target = $region29
    $region28: #{tpu_custom_call.1} parent=1 // pred_region
      _
    $region29: #{tpu_custom_call.1} parent=1 // pred_fallthru
      _
    // Predicated region
    $region30: #{tpu_custom_call.1} parent=1 // pred_check
      _
    $region31: #{tpu_custom_call.1} parent=1 // pred_check_branch
      %609 = sbr.rel (0) target = $region33
    $region32: #{tpu_custom_call.1} parent=1 // pred_region
      %611 = vsyncadd [#allocation5], 0
      %s612 = sshll.u32 [#allocation4], 4
      %s613 = int_to_ptr.vmem [resolvable:$true] %s612
      %s614 = sshll.u32 %s7, 4
      %s615 = int_to_ptr.hbm [resolvable:$true] %s614
      %620 = dma.vmem_to_hbm [thread:$0]  %s613, 2048, %s615, [#allocation5], 64, 64, 4
    $region33: #{tpu_custom_call.1} parent=1 // pred_fallthru
      _
    // Predicated region
    $region34: #{tpu_custom_call.1} parent=1 // pred_check
      _
    $region35: #{tpu_custom_call.1} parent=1 // pred_check_branch
      %622 = sbr.rel (0) target = $region37
    $region36: #{tpu_custom_call.1} parent=1 // pred_region
      %624 = dma.done [#allocation3], 1024
    $region37: #{tpu_custom_call.1} parent=1 // pred_fallthru
      _
    // Predicated region
    $region38: #{tpu_custom_call.1} parent=1 // pred_check
      _
    $region39: #{tpu_custom_call.1} parent=1 // pred_check_branch
      %626 = sbr.rel (0) target = $region41
    $region40: #{tpu_custom_call.1} parent=1 // pred_region
      _
    $region41: #{tpu_custom_call.1} parent=1 // pred_fallthru
      _
    // Predicated region
    $region42: #{tpu_custom_call.1} parent=1 // pred_check
      _
    $region43: #{tpu_custom_call.1} parent=1 // pred_check_branch
      %628 = sbr.rel (0) target = $region45
    $region44: #{tpu_custom_call.1} parent=1 // pred_region
      %630 = dma.done [#allocation5], 2048
    $region45: #{tpu_custom_call.1} parent=1 // pred_fallthru
      _
    %631 = vsyncpa [#allocation3], 1
    %632 = vsyncpa [#allocation5], 1

</llo_original>
